<compile_context>
chip_gen: v7x
topology: tpu7x:2x2x1
jax: 0.10.0
libtpu: 0.0.40
codegen_flags: <defaults>
</compile_context>

<pallas_src>
import functools

import jax
import jax.numpy as jnp
from jax.experimental import pallas as pl
from jax.experimental.pallas import tpu as pltpu

_LANES = 128
_SUBLANES = 8


def _round_up(x, m):
    return ((x + m - 1) // m) * m


def _ce_partial_kernel(logits_ref, labels_ref, out_ref, *, num_classes,
                       rows_per_tile, hw_real, needs_mask, ignore_index):
    """Per-tile partial sums of (logsumexp(logits) - logits[label]).

    logits_ref: (C, R, 128)  model-dtype logits, pixels lane+sublane dense
    labels_ref: (R, 128)     int32 labels
    out_ref:    (8, 128)     f32 per-lane partial sums for this (batch, tile)
    """
    t = pl.program_id(1)
    C = num_classes
    R = rows_per_tile
    num_chunks = R // _SUBLANES

    row_iota = jax.lax.broadcasted_iota(jnp.int32, (_SUBLANES, _LANES), 0)
    lane_iota = jax.lax.broadcasted_iota(jnp.int32, (_SUBLANES, _LANES), 1)

    def chunk_body(i, acc):
        r0 = i * _SUBLANES
        if not isinstance(r0, int):
            r0 = pl.multiple_of(r0, _SUBLANES)
        lab = labels_ref[pl.ds(r0, _SUBLANES), :]                     # (8,128) i32

        # Pass 1: running max over the class axis (streaming, no big temps).
        m = logits_ref[0, pl.ds(r0, _SUBLANES), :].astype(jnp.float32)
        for c in range(1, C):
            xc = logits_ref[c, pl.ds(r0, _SUBLANES), :].astype(jnp.float32)
            m = jnp.maximum(m, xc)

        # Pass 2: exp-sum and gather-by-label, one class slice at a time.
        s = jnp.zeros((_SUBLANES, _LANES), jnp.float32)
        picked = jnp.zeros((_SUBLANES, _LANES), jnp.float32)
        for c in range(C):
            xc = logits_ref[c, pl.ds(r0, _SUBLANES), :].astype(jnp.float32)
            s = s + jnp.exp(xc - m)
            picked = jnp.where(lab == c, xc, picked)

        loss = (m + jnp.log(s)) - picked                              # (8,128) f32
        if ignore_index is not None:
            loss = jnp.where(lab == ignore_index, 0.0, loss)
        if needs_mask:
            # mask pixels beyond the real H*W (boundary block / lane padding)
            gpix = (t * R + r0 + row_iota) * _LANES + lane_iota
            loss = jnp.where(gpix < hw_real, loss, 0.0)
        return acc + loss

    init = jnp.zeros((_SUBLANES, _LANES), jnp.float32)
    if num_chunks <= 8:
        acc = init
        for i in range(num_chunks):
            acc = chunk_body(i, acc)
    else:
        unroll = 4 if num_chunks % 4 == 0 else (2 if num_chunks % 2 == 0 else 1)
        acc = jax.lax.fori_loop(0, num_chunks, chunk_body, init, unroll=unroll)
    out_ref[...] = acc


def multiclass_cross_entropy(preds, labels, *, ignore_index=-100,
                             target_block_bytes=4 * 1024 * 1024):
    """preds: (N, C, H, W) float logits; labels: (N, H, W) int class ids.
    Returns scalar mean cross-entropy loss (float32), PyTorch-style mean over
    non-ignored pixels."""
    N, C, H, W = preds.shape
    HW = H * W
    dtype_bytes = jnp.dtype(preds.dtype).itemsize

    # Pad the pixel axis only up to lane/sublane granularity (never to a tile
    # multiple): for typical segmentation shapes (H*W a multiple of 1024) this
    # is a no-op and the logits are read exactly once from HBM.
    hw_pad = max(_round_up(HW, _LANES), _LANES * _SUBLANES)
    rows_total = hw_pad // _LANES                      # >= 8

    logits = preds.reshape(N, C, HW)                   # free reshape
    labs = labels.reshape(N, HW).astype(jnp.int32)
    if hw_pad != HW:
        # TODO(synk): only hit when H*W % 128 != 0 (or H*W < 1024); a shifted
        # last tile (pl.Element row offsets) could remove this copy entirely.
        logits = jnp.pad(logits, ((0, 0), (0, 0), (0, hw_pad - HW)))
        labs = jnp.pad(labs, ((0, 0), (0, hw_pad - HW)), constant_values=0)
    logits = logits.reshape(N, C, rows_total, _LANES)  # free reshape
    labs = labs.reshape(N, rows_total, _LANES)         # free reshape

    # Tile size scales with C: ~target_block_bytes of logits per block.
    cap_rows = (target_block_bytes // max(1, C * dtype_bytes * _LANES))
    cap_rows = max(_SUBLANES, (cap_rows // _SUBLANES) * _SUBLANES)
    cap_rows = min(cap_rows, 8192)                     # bound labels block <= 4 MiB
    rows_per_tile = max(_SUBLANES,
                        min(cap_rows, (rows_total // _SUBLANES) * _SUBLANES))
    num_t = pl.cdiv(rows_total, rows_per_tile)
    # keep >= 2 grid steps when possible so v7x's two TensorCores both get work
    if N * num_t < 2 and rows_total >= 2 * _SUBLANES:
        rows_per_tile = _round_up(pl.cdiv(rows_total, 2), _SUBLANES)
        num_t = pl.cdiv(rows_total, rows_per_tile)

    needs_mask = (num_t * rows_per_tile * _LANES != HW)

    kernel = functools.partial(
        _ce_partial_kernel, num_classes=C, rows_per_tile=rows_per_tile,
        hw_real=HW, needs_mask=needs_mask, ignore_index=ignore_index)

    cost = pl.CostEstimate(
        flops=6 * N * C * HW,
        transcendentals=N * HW * (C + 1),
        bytes_accessed=(N * C * hw_pad * dtype_bytes + N * hw_pad * 4
                        + N * num_t * _SUBLANES * _LANES * 4))

    partials = pl.pallas_call(
        kernel,
        out_shape=jax.ShapeDtypeStruct((N, num_t, _SUBLANES, _LANES), jnp.float32),
        grid_spec=pltpu.PrefetchScalarGridSpec(
            num_scalar_prefetch=0,
            grid=(N, num_t),
            in_specs=[
                # logits: full class extent, lane+sublane dense pixel tile
                pl.BlockSpec((None, C, rows_per_tile, _LANES),
                             lambda b, t: (b, 0, t, 0)),
                # labels: same pixel tile
                pl.BlockSpec((None, rows_per_tile, _LANES),
                             lambda b, t: (b, t, 0)),
            ],
            # per-(batch, tile) lane-dense partial sums -> both axes parallel
            out_specs=pl.BlockSpec((None, None, _SUBLANES, _LANES),
                                   lambda b, t: (b, t, 0, 0)),
        ),
        compiler_params=pltpu.CompilerParams(
            dimension_semantics=("parallel", "parallel"),
            vmem_limit_bytes=48 * 1024 * 1024,
        ),
        cost_estimate=cost,
    )(logits, labs)

    total = jnp.sum(partials)
    if ignore_index is None:
        denom = jnp.float32(N * HW)
    else:
        denom = jnp.sum(labels.reshape(-1) != ignore_index).astype(jnp.float32)
    return (total / denom).astype(jnp.float32)


class MultiClassCriterion:
    """Mirror of the PyTorch module for the 'CrossEntropy' loss type."""

    def __init__(self, loss_type='CrossEntropy', **kwargs):
        if loss_type != 'CrossEntropy':
            # 'Lovasz' raises NotImplementedError in the reference; FocalLoss
            # is undefined there.
            raise NotImplementedError(loss_type)
        # TODO(synk): per-class `weight=` of nn.CrossEntropyLoss is unsupported.
        self.ignore_index = kwargs.get('ignore_index', -100)

    def __call__(self, preds, labels):
        return multiclass_cross_entropy(preds, labels,
                                        ignore_index=self.ignore_index)


def _reference_ce(preds, labels):
    """Pure-JAX reference of nn.CrossEntropyLoss(reduction='mean')."""
    N, C, H, W = preds.shape
    x = jnp.transpose(preds, (0, 2, 3, 1)).reshape(-1, C).astype(jnp.float32)
    y = labels.reshape(-1)
    logp = jax.nn.log_softmax(x, axis=-1)
    nll = -jnp.take_along_axis(logp, y[:, None], axis=-1)[:, 0]
    return jnp.mean(nll)


if __name__ == "__main__":
    key = jax.random.PRNGKey(0)
    k1, k2 = jax.random.split(key)

    N, C, H, W = 2, 4, 16, 16
    preds = jax.random.normal(k1, (N, C, H, W), dtype=jnp.float32)
    labels = jax.random.randint(k2, (N, H, W), 0, C, dtype=jnp.int32)

    criterion = MultiClassCriterion(loss_type='CrossEntropy')
    loss = criterion(preds, labels)
    jax.block_until_ready(loss)

    ref = _reference_ce(preds, labels)
    assert jnp.allclose(loss, ref, atol=1e-5, rtol=1e-5), (loss, ref)

    print("KERNEL_OK")
</pallas_src>

<mosaic_0001>
module attributes {stable_mosaic.version = 11 : i64} {
  func.func @_ce_partial_kernel(%arg0: i32, %arg1: i32, %arg2: memref<1x4x8x128xf32, #tpu.memory_space<vmem>>, %arg3: memref<1x8x128xi32, #tpu.memory_space<vmem>>, %arg4: memref<1x1x8x128xf32, #tpu.memory_space<vmem>>) attributes {dimension_semantics = [#tpu.dimension_semantics<parallel>, #tpu.dimension_semantics<parallel>], iteration_bounds = array<i64: 2, 1>, scalar_prefetch = 0 : i64, scratch_operands = 0 : i64, tpu.core_type = #tpu.core_type<tc>, window_params = [{transform_indices = @transform_0, window_bounds = array<i64: 1, 4, 8, 128>}, {transform_indices = @transform_1, window_bounds = array<i64: 1, 8, 128>}, {transform_indices = @transform_2, window_bounds = array<i64: 1, 1, 8, 128>}]} {
    %0 = tpu.iota {dimensions = array<i32: 0>} : vector<8x128xi32>
    %1 = tpu.iota {dimensions = array<i32: 1>} : vector<8x128xi32>
    %cst = arith.constant 0.000000e+00 : f32
    %2 = vector.broadcast %cst : f32 to vector<8x128xf32>
    %c0 = arith.constant 0 : index
    %c0_0 = arith.constant 0 : index
    %c0_1 = arith.constant 0 : index
    %3 = vector.load %arg3[%c0, %c0_0, %c0_1] : memref<1x8x128xi32, #tpu.memory_space<vmem>>, vector<1x8x128xi32>
    %4 = vector.shape_cast %3 : vector<1x8x128xi32> to vector<8x128xi32>
    %c0_2 = arith.constant 0 : index
    %c0_3 = arith.constant 0 : index
    %c0_4 = arith.constant 0 : index
    %c0_5 = arith.constant 0 : index
    %5 = vector.load %arg2[%c0_2, %c0_3, %c0_4, %c0_5] : memref<1x4x8x128xf32, #tpu.memory_space<vmem>>, vector<1x1x8x128xf32>
    %6 = vector.shape_cast %5 : vector<1x1x8x128xf32> to vector<8x128xf32>
    %c0_6 = arith.constant 0 : index
    %c1 = arith.constant 1 : index
    %c0_7 = arith.constant 0 : index
    %c0_8 = arith.constant 0 : index
    %7 = vector.load %arg2[%c0_6, %c1, %c0_7, %c0_8] : memref<1x4x8x128xf32, #tpu.memory_space<vmem>>, vector<1x1x8x128xf32>
    %8 = vector.shape_cast %7 : vector<1x1x8x128xf32> to vector<8x128xf32>
    %9 = arith.maximumf %6, %8 : vector<8x128xf32>
    %c0_9 = arith.constant 0 : index
    %c2 = arith.constant 2 : index
    %c0_10 = arith.constant 0 : index
    %c0_11 = arith.constant 0 : index
    %10 = vector.load %arg2[%c0_9, %c2, %c0_10, %c0_11] : memref<1x4x8x128xf32, #tpu.memory_space<vmem>>, vector<1x1x8x128xf32>
    %11 = vector.shape_cast %10 : vector<1x1x8x128xf32> to vector<8x128xf32>
    %12 = arith.maximumf %9, %11 : vector<8x128xf32>
    %c0_12 = arith.constant 0 : index
    %c3 = arith.constant 3 : index
    %c0_13 = arith.constant 0 : index
    %c0_14 = arith.constant 0 : index
    %13 = vector.load %arg2[%c0_12, %c3, %c0_13, %c0_14] : memref<1x4x8x128xf32, #tpu.memory_space<vmem>>, vector<1x1x8x128xf32>
    %14 = vector.shape_cast %13 : vector<1x1x8x128xf32> to vector<8x128xf32>
    %15 = arith.maximumf %12, %14 : vector<8x128xf32>
    %cst_15 = arith.constant 0.000000e+00 : f32
    %16 = vector.broadcast %cst_15 : f32 to vector<8x128xf32>
    %cst_16 = arith.constant 0.000000e+00 : f32
    %17 = vector.broadcast %cst_16 : f32 to vector<8x128xf32>
    %c0_17 = arith.constant 0 : index
    %c0_18 = arith.constant 0 : index
    %c0_19 = arith.constant 0 : index
    %c0_20 = arith.constant 0 : index
    %18 = vector.load %arg2[%c0_17, %c0_18, %c0_19, %c0_20] : memref<1x4x8x128xf32, #tpu.memory_space<vmem>>, vector<1x1x8x128xf32>
    %19 = vector.shape_cast %18 : vector<1x1x8x128xf32> to vector<8x128xf32>
    %20 = arith.subf %19, %15 : vector<8x128xf32>
    %21 = math.exp %20 : vector<8x128xf32>
    %22 = arith.addf %16, %21 : vector<8x128xf32>
    %c0_i32 = arith.constant 0 : i32
    %23 = vector.broadcast %c0_i32 : i32 to vector<8x128xi32>
    %24 = arith.cmpi eq, %4, %23 : vector<8x128xi32>
    %25 = arith.select %24, %19, %17 : vector<8x128xi1>, vector<8x128xf32>
    %c0_21 = arith.constant 0 : index
    %c1_22 = arith.constant 1 : index
    %c0_23 = arith.constant 0 : index
    %c0_24 = arith.constant 0 : index
    %26 = vector.load %arg2[%c0_21, %c1_22, %c0_23, %c0_24] : memref<1x4x8x128xf32, #tpu.memory_space<vmem>>, vector<1x1x8x128xf32>
    %27 = vector.shape_cast %26 : vector<1x1x8x128xf32> to vector<8x128xf32>
    %28 = arith.subf %27, %15 : vector<8x128xf32>
    %29 = math.exp %28 : vector<8x128xf32>
    %30 = arith.addf %22, %29 : vector<8x128xf32>
    %c1_i32 = arith.constant 1 : i32
    %31 = vector.broadcast %c1_i32 : i32 to vector<8x128xi32>
    %32 = arith.cmpi eq, %4, %31 : vector<8x128xi32>
    %33 = arith.select %32, %27, %25 : vector<8x128xi1>, vector<8x128xf32>
    %c0_25 = arith.constant 0 : index
    %c2_26 = arith.constant 2 : index
    %c0_27 = arith.constant 0 : index
    %c0_28 = arith.constant 0 : index
    %34 = vector.load %arg2[%c0_25, %c2_26, %c0_27, %c0_28] : memref<1x4x8x128xf32, #tpu.memory_space<vmem>>, vector<1x1x8x128xf32>
    %35 = vector.shape_cast %34 : vector<1x1x8x128xf32> to vector<8x128xf32>
    %36 = arith.subf %35, %15 : vector<8x128xf32>
    %37 = math.exp %36 : vector<8x128xf32>
    %38 = arith.addf %30, %37 : vector<8x128xf32>
    %c2_i32 = arith.constant 2 : i32
    %39 = vector.broadcast %c2_i32 : i32 to vector<8x128xi32>
    %40 = arith.cmpi eq, %4, %39 : vector<8x128xi32>
    %41 = arith.select %40, %35, %33 : vector<8x128xi1>, vector<8x128xf32>
    %c0_29 = arith.constant 0 : index
    %c3_30 = arith.constant 3 : index
    %c0_31 = arith.constant 0 : index
    %c0_32 = arith.constant 0 : index
    %42 = vector.load %arg2[%c0_29, %c3_30, %c0_31, %c0_32] : memref<1x4x8x128xf32, #tpu.memory_space<vmem>>, vector<1x1x8x128xf32>
    %43 = vector.shape_cast %42 : vector<1x1x8x128xf32> to vector<8x128xf32>
    %44 = arith.subf %43, %15 : vector<8x128xf32>
    %45 = math.exp %44 : vector<8x128xf32>
    %46 = arith.addf %38, %45 : vector<8x128xf32>
    %c3_i32 = arith.constant 3 : i32
    %47 = vector.broadcast %c3_i32 : i32 to vector<8x128xi32>
    %48 = arith.cmpi eq, %4, %47 : vector<8x128xi32>
    %49 = arith.select %48, %43, %41 : vector<8x128xi1>, vector<8x128xf32>
    %50 = math.log %46 : vector<8x128xf32>
    %51 = arith.addf %15, %50 : vector<8x128xf32>
    %52 = arith.subf %51, %49 : vector<8x128xf32>
    %c-100_i32 = arith.constant -100 : i32
    %53 = vector.broadcast %c-100_i32 : i32 to vector<8x128xi32>
    %54 = arith.cmpi eq, %4, %53 : vector<8x128xi32>
    %cst_33 = arith.constant 0.000000e+00 : f32
    %55 = vector.broadcast %cst_33 : f32 to vector<8x128xf32>
    %56 = arith.select %54, %55, %52 : vector<8x128xi1>, vector<8x128xf32>
    %c8_i32 = arith.constant 8 : i32
    %57 = arith.muli %arg1, %c8_i32 : i32
    %c0_i32_34 = arith.constant 0 : i32
    %58 = arith.addi %57, %c0_i32_34 : i32
    %59 = vector.broadcast %58 : i32 to vector<8x128xi32>
    %60 = arith.addi %59, %0 : vector<8x128xi32>
    %c128_i32 = arith.constant 128 : i32
    %61 = vector.broadcast %c128_i32 : i32 to vector<8x128xi32>
    %62 = arith.muli %60, %61 : vector<8x128xi32>
    %63 = arith.addi %62, %1 : vector<8x128xi32>
    %c256_i32 = arith.constant 256 : i32
    %64 = vector.broadcast %c256_i32 : i32 to vector<8x128xi32>
    %65 = arith.cmpi slt, %63, %64 : vector<8x128xi32>
    %cst_35 = arith.constant 0.000000e+00 : f32
    %66 = vector.broadcast %cst_35 : f32 to vector<8x128xf32>
    %67 = arith.select %65, %56, %66 : vector<8x128xi1>, vector<8x128xf32>
    %68 = arith.addf %2, %67 : vector<8x128xf32>
    %c0_36 = arith.constant 0 : index
    %c0_37 = arith.constant 0 : index
    %c0_38 = arith.constant 0 : index
    %c0_39 = arith.constant 0 : index
    %69 = vector.load %arg4[%c0_36, %c0_37, %c0_38, %c0_39] : memref<1x1x8x128xf32, #tpu.memory_space<vmem>>, vector<1x1x8x128xf32>
    %70 = vector.shape_cast %69 : vector<1x1x8x128xf32> to vector<8x128xf32>
    %71 = vector.shape_cast %68 : vector<8x128xf32> to vector<1x1x8x128xf32>
    tpu.vector_store %arg4[%c0_36, %c0_37, %c0_38, %c0_39], %71 {strides = array<i32>} : memref<1x1x8x128xf32, #tpu.memory_space<vmem>>, vector<1x1x8x128xf32>,
    return
  }
  func.func @transform_0(%arg0: i32, %arg1: i32) -> (i32, i32, i32, i32) {
    %c0_i32 = arith.constant 0 : i32
    %c0_i32_0 = arith.constant 0 : i32
    %c0_i32_1 = arith.constant 0 : i32
    return %arg0, %c0_i32, %arg1, %c0_i32_0 : i32, i32, i32, i32
  }
  func.func @transform_1(%arg0: i32, %arg1: i32) -> (i32, i32, i32) {
    %c0_i32 = arith.constant 0 : i32
    %c0_i32_0 = arith.constant 0 : i32
    return %arg0, %arg1, %c0_i32 : i32, i32, i32
  }
  func.func @transform_2(%arg0: i32, %arg1: i32) -> (i32, i32, i32, i32) {
    %c0_i32 = arith.constant 0 : i32
    %c0_i32_0 = arith.constant 0 : i32
    %c0_i32_1 = arith.constant 0 : i32
    return %arg0, %arg1, %c0_i32, %c0_i32_0 : i32, i32, i32, i32
  }
}

</mosaic_0001>

<llo_original>
// kernel: tpu_custom_call.1
$region0: #{tpu_custom_call.1}
  #allocation0 [shape = 'u32[]', space=smem, size = 0x4, offset = 0x4, fixed_abs, tag = 'smem constant byte address 0x4 - core index']
  #allocation1 [shape = 'u32[144,128]{1,0:T(1,128)}', space=vmem, size = 0x12000, scoped, tag = 'internal scratch']
  %s0 = inlined_call_operand.hbm [shape: f32[2,4,8,128], index: 0, kind: input, shape index: {}]
  %s1 = inlined_call_operand.hbm [shape: s32[2,8,128], index: 1, kind: input, shape index: {}]
  %s2 = inlined_call_operand.hbm [shape: f32[2,1,8,128], index: 2, kind: output, shape index: {}]
  %s3 = sld [smem:[#allocation0]]
  $region49: #{tpu_custom_call.1} parent=0
    _
  %s5 = ssub.s32 1, %s3
  %s6 = scalar_select 0, %s5, %s3
  $region1: #{tpu_custom_call.1} parent=0
    #allocation2 [shape = 'u8[32768]{0}', space=vmem, size = 0x8000, scoped, tag = 'input window, operand 0']
    #allocation3 [shape = 's32[2]{0}', space=sflag, size = 0x8, scoped, tag = 'scoped memory for tpu_custom_call.1']
    #allocation4 [shape = 's32[2]{0}', space=sflag, size = 0x8, scoped, tag = 'scoped memory for tpu_custom_call.1']
    #allocation5 [shape = 'u8[8192]{0}', space=vmem, size = 0x2000, scoped, tag = 'input window, operand 1']
    #allocation6 [shape = 's32[2]{0}', space=sflag, size = 0x8, scoped, tag = 'scoped memory for tpu_custom_call.1']
    #allocation7 [shape = 'u8[8192]{0}', space=vmem, size = 0x2000, scoped, tag = 'output window, operand 0']
    %7 = vsyncpa [#allocation3], 0
    %s8 = scalar_lea.sflag [#allocation3], 1
    %9 = vsyncpa %s8, 0
    %10 = vsyncpa [#allocation6], 0
    %s11 = scalar_lea.sflag [#allocation6], 1
    %12 = vsyncpa %s11, 0
    %13 = vsyncpa [#allocation4], 0
    %s14 = scalar_lea.sflag [#allocation4], 1
    %15 = vsyncpa %s14, 0
    loop: start=0, step=1, limit=4
    $region2: #{tpu_custom_call.1} parent=1 // loop_pre_header
      _
    $region3: #{tpu_custom_call.1} parent=1 // loop_header
      %s17 = sphi 0, %s21
      %p18 = scmp.ge.s32.totalorder %s17, 4
      %s24 = sphi 0, %s36
      %s25 = sphi 0, %s32
      %s26 = sphi 0, %s24
      %s27 = sphi 0, %s25
      %s28 = sphi 0, %s26
      %s29 = sphi 0, %s27
      %s41 = sphi 0, %s43
      %s44 = sphi 0, %s41
      %s45 = sphi 0, %s44
      %s61 = sphi 0, %s45
      %s69 = sphi 0, %s71
      %s72 = sphi 0, %s69
      %s73 = sphi 0, %s72
      %s89 = sphi 0, %s73
      %s97 = sphi 0, %s99
      %s100 = sphi 0, %s97
      %s101 = sphi 0, %s100
      %s117 = sphi 0, %s101
    $region4: #{tpu_custom_call.1} parent=1 // loop_header_branch
      %20 = sbr.rel (%p18) target = $region8
    $region5: #{tpu_custom_call.1} parent=1 // loop_body
      %s22 = ssub.s32 %s17, 1
      %s23 = ssub.s32 %s17, 2
      %s30 = sadd.s32 1, %s25
      %p31 = scmp.ge.s32.totalorder %s30, 1
      %s32 = scalar_select %p31, 0, %s30
      %s33 = sadd.s32 1, %s24
      %s34 = scalar_select %p31, %s33, %s24
      %p35 = scmp.ge.s32.totalorder %s34, 2
      %s36 = scalar_select %p35, 0, %s34
      %s37 = ssub.s32 %s24, %s36
      %s38 = ssub.s32 %s25, %s32
      %s39 = sor.u32 %s37, %s38
      %p40 = scmp.eq.s32.totalorder %s39, 0
      %s42 = sadd.s32 %s41, 1
      %s43 = scalar_select %p40, %s41, %s42
      %p46 = pneg %p40
      %p47 = scmp.eq.s32.totalorder %s17, 1
      %p48 = por %p46, %p47
      %p49 = scmp.ne.s32.totalorder %s41, %s44
      %p50 = scmp.eq.s32.totalorder %s17, 0
      %p51 = por %p49, %p50
      %p52 = scmp.ne.s32.totalorder %s41, %s44
      %p53 = scmp.eq.s32.totalorder %s22, 1
      %p54 = por %p52, %p53
      %p55 = scmp.ne.s32.totalorder %s44, %s45
      %p56 = scmp.eq.s32.totalorder %s22, 0
      %p57 = por %p55, %p56
      %p58 = scmp.ne.s32.totalorder %s44, %s45
      %p59 = scmp.eq.s32.totalorder %s23, 1
      %p60 = por %p58, %p59
      %p62 = scmp.ne.s32.totalorder %s45, %s61
      %p63 = scmp.eq.s32.totalorder %s23, 0
      %p64 = por %p62, %p63
      %s65 = ssub.s32 %s24, %s36
      %s66 = ssub.s32 %s25, %s32
      %s67 = sor.u32 %s65, %s66
      %p68 = scmp.eq.s32.totalorder %s67, 0
      %s70 = sadd.s32 %s69, 1
      %s71 = scalar_select %p68, %s69, %s70
      %p74 = pneg %p68
      %p75 = scmp.eq.s32.totalorder %s17, 1
      %p76 = por %p74, %p75
      %p77 = scmp.ne.s32.totalorder %s69, %s72
      %p78 = scmp.eq.s32.totalorder %s17, 0
      %p79 = por %p77, %p78
      %p80 = scmp.ne.s32.totalorder %s69, %s72
      %p81 = scmp.eq.s32.totalorder %s22, 1
      %p82 = por %p80, %p81
      %p83 = scmp.ne.s32.totalorder %s72, %s73
      %p84 = scmp.eq.s32.totalorder %s22, 0
      %p85 = por %p83, %p84
      %p86 = scmp.ne.s32.totalorder %s72, %s73
      %p87 = scmp.eq.s32.totalorder %s23, 1
      %p88 = por %p86, %p87
      %p90 = scmp.ne.s32.totalorder %s73, %s89
      %p91 = scmp.eq.s32.totalorder %s23, 0
      %p92 = por %p90, %p91
      %s93 = ssub.s32 %s24, %s36
      %s94 = ssub.s32 %s25, %s32
      %s95 = sor.u32 %s93, %s94
      %p96 = scmp.eq.s32.totalorder %s95, 0
      %s98 = sadd.s32 %s97, 1
      %s99 = scalar_select %p96, %s97, %s98
      %p102 = pneg %p96
      %p103 = scmp.eq.s32.totalorder %s17, 1
      %p104 = por %p102, %p103
      %p105 = scmp.ne.s32.totalorder %s97, %s100
      %p106 = scmp.eq.s32.totalorder %s17, 0
      %p107 = por %p105, %p106
      %p108 = scmp.ne.s32.totalorder %s97, %s100
      %p109 = scmp.eq.s32.totalorder %s22, 1
      %p110 = por %p108, %p109
      %p111 = scmp.ne.s32.totalorder %s100, %s101
      %p112 = scmp.eq.s32.totalorder %s22, 0
      %p113 = por %p111, %p112
      %p114 = scmp.ne.s32.totalorder %s100, %s101
      %p115 = scmp.eq.s32.totalorder %s23, 1
      %p116 = por %p114, %p115
      %p118 = scmp.ne.s32.totalorder %s101, %s117
      %p119 = scmp.eq.s32.totalorder %s23, 0
      %p120 = por %p118, %p119
      %p121 = scmp.le.s32.totalorder 1, %s17
      %p122 = scmp.lt.s32.totalorder %s17, 3
      %p123 = pnand %p121, %p122
      %p124 = pneg %p123
      // Predicated region
      $region9: #{tpu_custom_call.1} parent=5 // pred_check
        _
      $region10: #{tpu_custom_call.1} parent=5 // pred_check_branch
        %126 = sbr.rel (%p123) target = $region12
      $region11: #{tpu_custom_call.1} parent=5 // pred_region
        %s127 = ssub.s32 %s17, 1
      $region12: #{tpu_custom_call.1} parent=5 // pred_fallthru
        _
      %p128 = scmp.lt.s32.totalorder %s17, 2
      // Predicated region
      $region13: #{tpu_custom_call.1} parent=5 // pred_check
        %p129 = pneg %p128
      $region14: #{tpu_custom_call.1} parent=5 // pred_check_branch
        %131 = sbr.rel (%p129) target = $region16
      $region15: #{tpu_custom_call.1} parent=5 // pred_region
        // Predicated region
        $region17: #{tpu_custom_call.1} parent=15 // pred_check
          %p132 = pneg %p51
        $region18: #{tpu_custom_call.1} parent=15 // pred_check_branch
          %134 = sbr.rel (%p132) target = $region20
        $region19: #{tpu_custom_call.1} parent=15 // pred_region
          %s135 = sand.u32 %s41, 1
          %s136 = scalar_lea.sflag [#allocation3], %s135
          %s137 = sand.u32 %s41, 1
          %s138 = smul.addr %s137, 32
          %s139 = scalar_lea.vmem [#allocation2], %s138
          %s141 = ssub.s32 512, 512
          %142 = vsyncadd %s136, %s141
          %s143 = smul.addr %s24, 4
          %s144 = sadd.s32 %s25, %s143
          %s145 = smul.addr %s144, 128
          %s146 = scalar_lea.hbm %s0, %s145
          %s147 = sshll.u32 %s139, 4
          %s148 = int_to_ptr.vmem [resolvable:$true] %s147
          %153 = dma.hbm_to_vmem [thread:$0]  %s146, 512, %s148, %s136, 128, 128, 8
        $region20: #{tpu_custom_call.1} parent=15 // pred_fallthru
          _
        // Predicated region
        $region21: #{tpu_custom_call.1} parent=15 // pred_check
          %p154 = pneg %p79
        $region22: #{tpu_custom_call.1} parent=15 // pred_check_branch
          %156 = sbr.rel (%p154) target = $region24
        $region23: #{tpu_custom_call.1} parent=15 // pred_region
          %s157 = sand.u32 %s69, 1
          %s158 = scalar_lea.sflag [#allocation6], %s157
          %s159 = sand.u32 %s69, 1
          %s160 = smul.addr %s159, 8
          %s161 = scalar_lea.vmem [#allocation5], %s160
          %s163 = ssub.s32 128, 128
          %164 = vsyncadd %s158, %s163
          %s165 = sadd.s32 %s25, %s24
          %s166 = smul.addr %s165, 128
          %s167 = scalar_lea.hbm %s1, %s166
          %s169 = sshll.u32 %s161, 4
          %s170 = int_to_ptr.vmem [resolvable:$true] %s169
          %172 = dma.hbm_to_vmem [thread:$0]  %s167, 128, %s170, %s158
        $region24: #{tpu_custom_call.1} parent=15 // pred_fallthru
          _
      $region16: #{tpu_custom_call.1} parent=5 // pred_fallthru
        _
      %p173 = scmp.le.s32.totalorder 1, %s17
      %p174 = scmp.lt.s32.totalorder %s17, 3
      %p175 = pnand %p173, %p174
      %p176 = pneg %p175
      // Predicated region
      $region25: #{tpu_custom_call.1} parent=5 // pred_check
        _
      $region26: #{tpu_custom_call.1} parent=5 // pred_check_branch
        %178 = sbr.rel (%p175) target = $region28
      $region27: #{tpu_custom_call.1} parent=5 // pred_region
        %s179 = ssub.s32 %s17, 1
        %s180 = sand.u32 %s44, 1
        %s181 = scalar_lea.sflag [#allocation3], %s180
        %s182 = sand.u32 %s44, 1
        %s183 = smul.addr %s182, 32
        %s184 = scalar_lea.vmem [#allocation2], %s183
        // Predicated region
        $region29: #{tpu_custom_call.1} parent=27 // pred_check
          %p185 = pneg %p57
        $region30: #{tpu_custom_call.1} parent=27 // pred_check_branch
          %187 = sbr.rel (%p185) target = $region32
        $region31: #{tpu_custom_call.1} parent=27 // pred_region
          %188 = dma.done %s181, 512
        $region32: #{tpu_custom_call.1} parent=27 // pred_fallthru
          _
        %s189 = sand.u32 %s72, 1
        %s190 = scalar_lea.sflag [#allocation6], %s189
        %s191 = sand.u32 %s72, 1
        %s192 = smul.addr %s191, 8
        %s193 = scalar_lea.vmem [#allocation5], %s192
        // Predicated region
        $region33: #{tpu_custom_call.1} parent=27 // pred_check
          %p194 = pneg %p85
        $region34: #{tpu_custom_call.1} parent=27 // pred_check_branch
          %196 = sbr.rel (%p194) target = $region36
        $region35: #{tpu_custom_call.1} parent=27 // pred_region
          %197 = dma.done %s190, 128
        $region36: #{tpu_custom_call.1} parent=27 // pred_fallthru
          _
        %s198 = sand.u32 %s44, 1
        %s199 = scalar_lea.sflag [#allocation3], %s198
        %s200 = sand.u32 %s44, 1
        %s201 = smul.addr %s200, 32
        %s202 = scalar_lea.vmem [#allocation2], %s201
        %p203 = pneg %p57
        %p204 = pneg %p54
        %s205 = sand.u32 %s72, 1
        %s206 = scalar_lea.sflag [#allocation6], %s205
        %s207 = sand.u32 %s72, 1
        %s208 = smul.addr %s207, 8
        %s209 = scalar_lea.vmem [#allocation5], %s208
        %p210 = pneg %p85
        %p211 = pneg %p82
        %p212 = pneg %p113
        %p213 = pneg %p110
        %s214 = sand.u32 %s100, 1
        %s215 = scalar_lea.sflag [#allocation4], %s214
        %s216 = sand.u32 %s100, 1
        %s217 = smul.addr %s216, 8
        %s218 = scalar_lea.vmem [#allocation7], %s217
        %v219 = vlaneseq
        %v220 = vshrl.u32 %v219, 7
        %v221 = vlaneseq
        %v222 = vand.u32 %v221, 127
        %v223 = vld [vmem:[%s193] sm:$0xff]
        %v224 = vld [vmem:[%s184] sm:$0xff]
        %s225 = scalar_lea.vmem %s184, 8 [#allocation2]
        %v226 = vld [vmem:[%s225] sm:$0xff]
        %v227 = vmax.f32 %v224, %v226
        %s228 = scalar_lea.vmem %s184, 16 [#allocation2]
        %v229 = vld [vmem:[%s228] sm:$0xff]
        %v230 = vmax.f32 %v227, %v229
        %s231 = scalar_lea.vmem %s184, 24 [#allocation2]
        %v232 = vld [vmem:[%s231] sm:$0xff]
        %v233 = vmax.f32 %v230, %v232
        %v234 = vsub.f32 %v224, %v233
        %v235 = vmul.f32 %v234, 1.442695
        %v236 = vpow.pop %v235
        %v237 = vadd.f32 %v236, 0.0
        %vm238 = vcmp.eq.s32.totalorder %v223, 0
        %v239 = vsel %vm238, %v224, 0.0
        %v240 = vsub.f32 %v226, %v233
        %v241 = vmul.f32 %v240, 1.442695
        %v242 = vpow.pop %v241
        %v243 = vadd.f32 %v237, %v242
        %vm244 = vcmp.eq.s32.totalorder %v223, 1
        %v245 = vsel %vm244, %v226, %v239
        %v246 = vsub.f32 %v229, %v233
        %v247 = vmul.f32 %v246, 1.442695
        %v248 = vpow.pop %v247
        %v249 = vadd.f32 %v243, %v248
        %vm250 = vcmp.eq.s32.totalorder %v223, 2
        %v251 = vsel %vm250, %v229, %v245
        %v252 = vsub.f32 %v232, %v233
        %v253 = vmul.f32 %v252, 1.442695
        %v254 = vpow.pop %v253
        %v255 = vadd.f32 %v249, %v254
        %vm256 = vcmp.eq.s32.totalorder %v223, 3
        %v257 = vsel %vm256, %v232, %v251
        %v258 = vlog2.pop %v255
        %v259 = vmul.f32 %v258, 0.6931472
        %v260 = vadd.f32 %v233, %v259
        %v261 = vsub.f32 %v260, %v257
        %vm262 = vcmp.eq.s32.totalorder %v223, 4294967196
        %v263 = vsel %vm262, 0.0, %v261
        %s264 = smul.u32 %s27, 8
        %v265 = vstv %s264
        %v266 = vadd.s32 %v265, %v220
        %v267 = vmul.u32 %v266, 128
        %v268 = vadd.s32 %v267, %v222
        %vm269 = vcmp.lt.s32.totalorder %v268, 256
        %v270 = vsel %vm269, %v263, 0.0
        %v271 = vadd.f32 %v270, 0.0
        %272 = vst [vmem:[%s218] sm:$0xff] %v271
        %s273 = sand.u32 %s100, 1
        %s274 = scalar_lea.sflag [#allocation4], %s273
        %s275 = sand.u32 %s100, 1
        %s276 = smul.addr %s275, 8
        %s277 = scalar_lea.vmem [#allocation7], %s276
        // Predicated region
        $region37: #{tpu_custom_call.1} parent=27 // pred_check
          %p278 = pneg %p110
        $region38: #{tpu_custom_call.1} parent=27 // pred_check_branch
          %280 = sbr.rel (%p278) target = $region40
        $region39: #{tpu_custom_call.1} parent=27 // pred_region
          %s282 = ssub.s32 128, 128
          %283 = vsyncadd %s274, %s282
          %s284 = sadd.s32 %s27, %s26
          %s285 = smul.addr %s284, 128
          %s286 = scalar_lea.hbm %s2, %s285
          %s288 = sshll.u32 %s277, 4
          %s289 = int_to_ptr.vmem [resolvable:$true] %s288
          %291 = dma.vmem_to_hbm [thread:$0]  %s289, 128, %s286, %s274
        $region40: #{tpu_custom_call.1} parent=27 // pred_fallthru
          _
      $region28: #{tpu_custom_call.1} parent=5 // pred_fallthru
        _
      %p292 = scmp.le.s32.totalorder 2, %s17
      // Predicated region
      $region41: #{tpu_custom_call.1} parent=5 // pred_check
        %p293 = pneg %p292
      $region42: #{tpu_custom_call.1} parent=5 // pred_check_branch
        %295 = sbr.rel (%p293) target = $region44
      $region43: #{tpu_custom_call.1} parent=5 // pred_region
        %s296 = ssub.s32 %s17, 2
        // Predicated region
        $region45: #{tpu_custom_call.1} parent=43 // pred_check
          %p297 = pneg %p116
        $region46: #{tpu_custom_call.1} parent=43 // pred_check_branch
          %299 = sbr.rel (%p297) target = $region48
        $region47: #{tpu_custom_call.1} parent=43 // pred_region
          %s300 = sand.u32 %s101, 1
          %s301 = scalar_lea.sflag [#allocation4], %s300
          %s302 = sand.u32 %s101, 1
          %s303 = smul.addr %s302, 8
          %s304 = scalar_lea.vmem [#allocation7], %s303
          %305 = dma.done %s301, 128
        $region48: #{tpu_custom_call.1} parent=43 // pred_fallthru
          _
      $region44: #{tpu_custom_call.1} parent=5 // pred_fallthru
        _
    $region6: #{tpu_custom_call.1} parent=1 // loop_footer
      %s21 = sadd.s32 1, %s17
    $region7: #{tpu_custom_call.1} parent=1 // loop_footer_branch
      %16 = sbr.rel target = $region3
    $region8: #{tpu_custom_call.1} parent=1 // loop_exit
      _
    %306 = vsyncpa [#allocation3], 1
    %s307 = scalar_lea.sflag [#allocation3], 1
    %308 = vsyncpa %s307, 1
    %309 = vsyncpa [#allocation6], 1
    %s310 = scalar_lea.sflag [#allocation6], 1
    %311 = vsyncpa %s310, 1
    %312 = vsyncpa [#allocation4], 1
    %s313 = scalar_lea.sflag [#allocation4], 1
    %314 = vsyncpa %s313, 1

</llo_original>
